<compile_context>
chip_gen: v7x
topology: tpu7x:2x2x1
jax: 0.10.0
libtpu: 0.0.40
codegen_flags: <defaults>
</compile_context>

<pallas_src>
import functools
import math

import jax
import jax.numpy as jnp
import numpy as np
from jax.experimental import pallas as pl
from jax.experimental.pallas import tpu as pltpu

N_INPUT = 82
N_HID = 24          # self.n
DIM_K = 4
DIM_V = 18
NUM_HEADS = 2
DK = DIM_K // NUM_HEADS   # 2
DV = DIM_V // NUM_HEADS   # 9
N_OUT = 2

_INV_SQRT2 = 1.0 / math.sqrt(2.0)
_NORM = 1.0 / math.sqrt(DK)          # MultiHeadSelfAttention._norm_fact


def _gelu_exact(x):
    # PyTorch F.gelu default (approximate='none'): 0.5*x*(1+erf(x/sqrt(2)))
    return 0.5 * x * (1.0 + jax.lax.erf(x * _INV_SQRT2))


def transformer_kernel(x_ref, w1t_ref, b1_ref, wqkv_ref, w5e_ref, w5o_ref,
                       b5_ref, out_ref):
    # ---- fc1 (batch-major MXU matmul) ----
    h = jnp.dot(x_ref[...], w1t_ref[...],
                preferred_element_type=jnp.float32)            # (TB, 24)

    # One small transpose to go feature-major (batch in lanes) so every
    # elementwise op below is lane-dense.
    hT = jnp.transpose(h)                                      # (24, TB)
    hT = _gelu_exact(hT + b1_ref[...])                         # bias + GELU
    # TODO(synk): dropout(p=0.05) treated as inference-mode identity (no RNG).

    # ---- fused q/k/v projection: (26,24) @ (24,TB) -> (26,TB) ----
    qkv = jnp.dot(wqkv_ref[...], hT, preferred_element_type=jnp.float32)

    # rows: [0:2]=q head0, [2:4]=q head1, [4:6]=k head0, [6:8]=k head1,
    #       [8:17]=v head0, [17:26]=v head1
    q0a, q0b = qkv[0:1, :], qkv[1:2, :]
    q1a, q1b = qkv[2:3, :], qkv[3:4, :]
    k0a, k0b = qkv[4:5, :], qkv[5:6, :]
    k1a, k1b = qkv[6:7, :], qkv[7:8, :]
    v0 = qkv[8:8 + DV, :]                                      # (9, TB)
    v1 = qkv[8 + DV:8 + 2 * DV, :]                             # (9, TB)

    # ---- 2x2 attention scores: explicit 2-term sums, pure VPU ----
    s00 = (q0a * k0a + q0b * k0b) * _NORM                      # (1, TB)
    s01 = (q0a * k1a + q0b * k1b) * _NORM
    s10 = (q1a * k0a + q1b * k0b) * _NORM
    s11 = (q1a * k1a + q1b * k1b) * _NORM

    # softmax over j (stable); reciprocal on the otherwise-idle EUP slot
    m0 = jnp.maximum(s00, s01)
    e00, e01 = jnp.exp(s00 - m0), jnp.exp(s01 - m0)
    inv_d0 = pl.reciprocal(e00 + e01, approx=True)
    a00, a01 = e00 * inv_d0, e01 * inv_d0

    m1 = jnp.maximum(s10, s11)
    e10, e11 = jnp.exp(s10 - m1), jnp.exp(s11 - m1)
    inv_d1 = pl.reciprocal(e10 + e11, approx=True)
    a10, a11 = e10 * inv_d1, e11 * inv_d1

    # att[b, i, :] = sum_j dist[b, i, j] * v[b, j, :]
    att0 = a00 * v0 + a01 * v1                                 # (9, TB)
    att1 = a10 * v0 + a11 * v1                                 # (9, TB)

    # GELU (elementwise, so per-head == on the interleaved (B,18) tensor)
    g0 = _gelu_exact(att0)
    g1 = _gelu_exact(att1)

    # ---- fc5 with the head interleave folded into even/odd W5 columns ----
    logits = (jnp.dot(w5e_ref[...], g0, preferred_element_type=jnp.float32)
              + jnp.dot(w5o_ref[...], g1, preferred_element_type=jnp.float32)
              + b5_ref[...])                                   # (2, TB)

    # ---- final softmax over the 2 classes (explicit, lane-dense) ----
    l0, l1 = logits[0:1, :], logits[1:2, :]
    m = jnp.maximum(l0, l1)
    e0, e1 = jnp.exp(l0 - m), jnp.exp(l1 - m)
    inv = pl.reciprocal(e0 + e1, approx=True)
    out_ref[...] = jnp.concatenate([e0 * inv, e1 * inv], axis=0)  # (2, TB)


@functools.partial(jax.jit, static_argnames=("block_batch",))
def transformer_forward(x, params, *, block_batch=512):
    """x: (B, 82) float32 -> (B, 2) float32 softmax probabilities."""
    b = x.shape[0]
    tb = int(block_batch)
    assert tb % 128 == 0, "block_batch must be a multiple of 128 (lane width)"
    b_pad = ((b + tb - 1) // tb) * tb

    w1, b1, wq, wk, wv, w5, b5 = (params[k] for k in
                                  ("w1", "b1", "wq", "wk", "wv", "w5", "b5"))
    # Glue (tiny, runs once in XLA): transpose / concat / slice the weights.
    w1_t = w1.T                                    # (82, 24)
    wqkv = jnp.concatenate([wq, wk, wv], axis=0)   # (26, 24) fused q/k/v proj
    w5e = w5[:, 0::2]                              # (2, 9) cols hitting head-0
    w5o = w5[:, 1::2]                              # (2, 9) cols hitting head-1
    b1_c = b1.reshape(N_HID, 1)                    # feature-major biases
    b5_c = b5.reshape(N_OUT, 1)

    x_p = x if b_pad == b else jnp.pad(x, ((0, b_pad - b), (0, 0)))

    const2 = lambda i: (0, 0)
    out_fm = pl.pallas_call(
        transformer_kernel,
        out_shape=jax.ShapeDtypeStruct((N_OUT, b_pad), jnp.float32),
        grid=(b_pad // tb,),
        in_specs=[
            pl.BlockSpec((tb, N_INPUT), lambda i: (i, 0)),        # x tile
            pl.BlockSpec((N_INPUT, N_HID), const2),               # W1^T
            pl.BlockSpec((N_HID, 1), const2),                     # b1
            pl.BlockSpec((2 * DIM_K + DIM_V, N_HID), const2),     # Wqkv
            pl.BlockSpec((N_OUT, DV), const2),                    # W5 even cols
            pl.BlockSpec((N_OUT, DV), const2),                    # W5 odd cols
            pl.BlockSpec((N_OUT, 1), const2),                     # b5
        ],
        out_specs=pl.BlockSpec((N_OUT, tb), lambda i: (0, i)),    # lane-dense
        compiler_params=pltpu.CompilerParams(
            dimension_semantics=("parallel",)),
    )(x_p, w1_t, b1_c, wqkv, w5e, w5o, b5_c)

    return out_fm[:, :b].T                                        # (B, 2)


def _reference_forward(x, params):
    """Pure-JAX replica of the PyTorch forward (for verification)."""
    w1, b1, wq, wk, wv, w5, b5 = (params[k] for k in
                                  ("w1", "b1", "wq", "wk", "wv", "w5", "b5"))
    batch = x.shape[0]
    x1 = x @ w1.T + b1
    x1 = jax.nn.gelu(x1, approximate=False)        # exact gelu, dropout=eval
    q = (x1 @ wq.T).reshape(batch, NUM_HEADS, DK)
    k = (x1 @ wk.T).reshape(batch, NUM_HEADS, DK)
    v = (x1 @ wv.T).reshape(batch, NUM_HEADS, DV)
    dist = jnp.einsum("bid,bjd->bij", q, k) / math.sqrt(DK)
    dist = jax.nn.softmax(dist, axis=-1)
    att = jnp.einsum("bij,bjd->bid", dist, v)
    att = jnp.transpose(att, (0, 2, 1)).reshape(batch, DIM_V)
    x2 = jax.nn.gelu(att, approximate=False)
    x5 = x2 @ w5.T + b5
    return jax.nn.softmax(x5, axis=1)


def _init_params(key):
    ks = jax.random.split(key, 7)

    def rnd(k, shape, scale):
        return scale * jax.random.normal(k, shape, dtype=jnp.float32)

    return {
        "w1": rnd(ks[0], (N_HID, N_INPUT), 1.0 / math.sqrt(N_INPUT)),
        "b1": rnd(ks[1], (N_HID,), 0.05),
        "wq": rnd(ks[2], (DIM_K, N_HID), 1.0 / math.sqrt(N_HID)),
        "wk": rnd(ks[3], (DIM_K, N_HID), 1.0 / math.sqrt(N_HID)),
        "wv": rnd(ks[4], (DIM_V, N_HID), 1.0 / math.sqrt(N_HID)),
        "w5": rnd(ks[5], (N_OUT, DIM_V), 1.0 / math.sqrt(DIM_V)),
        "b5": rnd(ks[6], (N_OUT,), 0.05),
    }


if __name__ == "__main__":
    key = jax.random.PRNGKey(0)
    k_param, k_x = jax.random.split(key)
    params = _init_params(k_param)

    batch = 200                     # not a multiple of the tile -> exercises
    x = jax.random.normal(k_x, (batch, N_INPUT), dtype=jnp.float32)

    # small tile so the 1-D batch grid has >1 step (padding to 256, grid=(2,))
    out = transformer_forward(x, params, block_batch=128)
    out = jax.block_until_ready(out)

    ref = _reference_forward(x, params)
    # tolerance loosened slightly vs 1e-5 because the softmax denominators use
    # the EUP approximate reciprocal (pl.reciprocal(approx=True)).
    np.testing.assert_allclose(np.asarray(out), np.asarray(ref),
                               rtol=2e-3, atol=2e-3)
    print("KERNEL_OK")
</pallas_src>

<mosaic_0001>
module attributes {stable_mosaic.version = 11 : i64} {
  func.func @transformer_kernel(%arg0: i32, %arg1: memref<128x82xf32, #tpu.memory_space<vmem>>, %arg2: memref<82x24xf32, #tpu.memory_space<vmem>>, %arg3: memref<24x1xf32, #tpu.memory_space<vmem>>, %arg4: memref<26x24xf32, #tpu.memory_space<vmem>>, %arg5: memref<2x9xf32, #tpu.memory_space<vmem>>, %arg6: memref<2x9xf32, #tpu.memory_space<vmem>>, %arg7: memref<2x1xf32, #tpu.memory_space<vmem>>, %arg8: memref<2x128xf32, #tpu.memory_space<vmem>>) attributes {dimension_semantics = [#tpu.dimension_semantics<parallel>], iteration_bounds = array<i64: 2>, scalar_prefetch = 0 : i64, scratch_operands = 0 : i64, tpu.core_type = #tpu.core_type<tc>, window_params = [{transform_indices = @transform_0, window_bounds = array<i64: 128, 82>}, {pipeline_mode = #tpu.pipeline_mode<synchronous>, transform_indices = @transform_1, window_bounds = array<i64: 82, 24>}, {pipeline_mode = #tpu.pipeline_mode<synchronous>, transform_indices = @transform_2, window_bounds = array<i64: 24, 1>}, {pipeline_mode = #tpu.pipeline_mode<synchronous>, transform_indices = @transform_3, window_bounds = array<i64: 26, 24>}, {pipeline_mode = #tpu.pipeline_mode<synchronous>, transform_indices = @transform_4, window_bounds = array<i64: 2, 9>}, {pipeline_mode = #tpu.pipeline_mode<synchronous>, transform_indices = @transform_5, window_bounds = array<i64: 2, 9>}, {pipeline_mode = #tpu.pipeline_mode<synchronous>, transform_indices = @transform_6, window_bounds = array<i64: 2, 1>}, {transform_indices = @transform_7, window_bounds = array<i64: 2, 128>}]} {
    %c0 = arith.constant 0 : index
    %c0_0 = arith.constant 0 : index
    %0 = vector.load %arg1[%c0, %c0_0] : memref<128x82xf32, #tpu.memory_space<vmem>>, vector<128x82xf32>
    %c0_1 = arith.constant 0 : index
    %c0_2 = arith.constant 0 : index
    %1 = vector.load %arg2[%c0_1, %c0_2] : memref<82x24xf32, #tpu.memory_space<vmem>>, vector<82x24xf32>
    %cst = arith.constant dense<0.000000e+00> : vector<128x24xf32>
    %2 = tpu.matmul %0, %1, %cst {dimension_numbers = #tpu.dot_dimension_numbers<[1], [0], [0], [1], [0, 0, 1, 1], [], []>} : vector<128x82xf32>, vector<82x24xf32>, vector<128x24xf32> -> vector<128x24xf32>
    %3 = tpu.transpose %2, [1, 0] : vector<128x24xf32> -> vector<24x128xf32>
    %c0_3 = arith.constant 0 : index
    %c0_4 = arith.constant 0 : index
    %4 = vector.load %arg3[%c0_3, %c0_4] : memref<24x1xf32, #tpu.memory_space<vmem>>, vector<24x1xf32>
    %5 = vector.broadcast %4 : vector<24x1xf32> to vector<24x128xf32>
    %6 = arith.addf %3, %5 : vector<24x128xf32>
    %cst_5 = arith.constant 5.000000e-01 : f32
    %7 = vector.broadcast %cst_5 : f32 to vector<24x128xf32>
    %8 = arith.mulf %7, %6 : vector<24x128xf32>
    %cst_6 = arith.constant 0.707106769 : f32
    %9 = vector.broadcast %cst_6 : f32 to vector<24x128xf32>
    %10 = arith.mulf %6, %9 : vector<24x128xf32>
    %11 = math.erf %10 : vector<24x128xf32>
    %cst_7 = arith.constant 1.000000e+00 : f32
    %12 = vector.broadcast %cst_7 : f32 to vector<24x128xf32>
    %13 = arith.addf %12, %11 : vector<24x128xf32>
    %14 = arith.mulf %8, %13 : vector<24x128xf32>
    %c0_8 = arith.constant 0 : index
    %c0_9 = arith.constant 0 : index
    %15 = vector.load %arg4[%c0_8, %c0_9] : memref<26x24xf32, #tpu.memory_space<vmem>>, vector<26x24xf32>
    %cst_10 = arith.constant dense<0.000000e+00> : vector<26x128xf32>
    %16 = tpu.matmul %15, %14, %cst_10 {dimension_numbers = #tpu.dot_dimension_numbers<[1], [0], [0], [1], [0, 0, 1, 1], [], []>} : vector<26x24xf32>, vector<24x128xf32>, vector<26x128xf32> -> vector<26x128xf32>
    %17 = vector.extract_strided_slice %16 {offsets = [0, 0], sizes = [1, 128], strides = [1, 1]} : vector<26x128xf32> to vector<1x128xf32>
    %18 = vector.extract_strided_slice %16 {offsets = [1, 0], sizes = [1, 128], strides = [1, 1]} : vector<26x128xf32> to vector<1x128xf32>
    %19 = vector.extract_strided_slice %16 {offsets = [2, 0], sizes = [1, 128], strides = [1, 1]} : vector<26x128xf32> to vector<1x128xf32>
    %20 = vector.extract_strided_slice %16 {offsets = [3, 0], sizes = [1, 128], strides = [1, 1]} : vector<26x128xf32> to vector<1x128xf32>
    %21 = vector.extract_strided_slice %16 {offsets = [4, 0], sizes = [1, 128], strides = [1, 1]} : vector<26x128xf32> to vector<1x128xf32>
    %22 = vector.extract_strided_slice %16 {offsets = [5, 0], sizes = [1, 128], strides = [1, 1]} : vector<26x128xf32> to vector<1x128xf32>
    %23 = vector.extract_strided_slice %16 {offsets = [6, 0], sizes = [1, 128], strides = [1, 1]} : vector<26x128xf32> to vector<1x128xf32>
    %24 = vector.extract_strided_slice %16 {offsets = [7, 0], sizes = [1, 128], strides = [1, 1]} : vector<26x128xf32> to vector<1x128xf32>
    %25 = vector.extract_strided_slice %16 {offsets = [8, 0], sizes = [9, 128], strides = [1, 1]} : vector<26x128xf32> to vector<9x128xf32>
    %26 = vector.extract_strided_slice %16 {offsets = [17, 0], sizes = [9, 128], strides = [1, 1]} : vector<26x128xf32> to vector<9x128xf32>
    %27 = arith.mulf %17, %21 : vector<1x128xf32>
    %28 = arith.mulf %18, %22 : vector<1x128xf32>
    %29 = arith.addf %27, %28 : vector<1x128xf32>
    %cst_11 = arith.constant 0.707106769 : f32
    %30 = vector.broadcast %cst_11 : f32 to vector<1x128xf32>
    %31 = arith.mulf %29, %30 : vector<1x128xf32>
    %32 = arith.mulf %17, %23 : vector<1x128xf32>
    %33 = arith.mulf %18, %24 : vector<1x128xf32>
    %34 = arith.addf %32, %33 : vector<1x128xf32>
    %cst_12 = arith.constant 0.707106769 : f32
    %35 = vector.broadcast %cst_12 : f32 to vector<1x128xf32>
    %36 = arith.mulf %34, %35 : vector<1x128xf32>
    %37 = arith.mulf %19, %21 : vector<1x128xf32>
    %38 = arith.mulf %20, %22 : vector<1x128xf32>
    %39 = arith.addf %37, %38 : vector<1x128xf32>
    %cst_13 = arith.constant 0.707106769 : f32
    %40 = vector.broadcast %cst_13 : f32 to vector<1x128xf32>
    %41 = arith.mulf %39, %40 : vector<1x128xf32>
    %42 = arith.mulf %19, %23 : vector<1x128xf32>
    %43 = arith.mulf %20, %24 : vector<1x128xf32>
    %44 = arith.addf %42, %43 : vector<1x128xf32>
    %cst_14 = arith.constant 0.707106769 : f32
    %45 = vector.broadcast %cst_14 : f32 to vector<1x128xf32>
    %46 = arith.mulf %44, %45 : vector<1x128xf32>
    %47 = arith.maximumf %31, %36 : vector<1x128xf32>
    %48 = arith.subf %31, %47 : vector<1x128xf32>
    %49 = math.exp %48 : vector<1x128xf32>
    %50 = arith.subf %36, %47 : vector<1x128xf32>
    %51 = math.exp %50 : vector<1x128xf32>
    %52 = arith.addf %49, %51 : vector<1x128xf32>
    %53 = tpu.reciprocal %52 {approx = true} : vector<1x128xf32> -> vector<1x128xf32>
    %54 = arith.mulf %49, %53 : vector<1x128xf32>
    %55 = arith.mulf %51, %53 : vector<1x128xf32>
    %56 = arith.maximumf %41, %46 : vector<1x128xf32>
    %57 = arith.subf %41, %56 : vector<1x128xf32>
    %58 = math.exp %57 : vector<1x128xf32>
    %59 = arith.subf %46, %56 : vector<1x128xf32>
    %60 = math.exp %59 : vector<1x128xf32>
    %61 = arith.addf %58, %60 : vector<1x128xf32>
    %62 = tpu.reciprocal %61 {approx = true} : vector<1x128xf32> -> vector<1x128xf32>
    %63 = arith.mulf %58, %62 : vector<1x128xf32>
    %64 = arith.mulf %60, %62 : vector<1x128xf32>
    %65 = vector.broadcast %54 : vector<1x128xf32> to vector<9x128xf32>
    %66 = arith.mulf %65, %25 : vector<9x128xf32>
    %67 = vector.broadcast %55 : vector<1x128xf32> to vector<9x128xf32>
    %68 = arith.mulf %67, %26 : vector<9x128xf32>
    %69 = arith.addf %66, %68 : vector<9x128xf32>
    %70 = vector.broadcast %63 : vector<1x128xf32> to vector<9x128xf32>
    %71 = arith.mulf %70, %25 : vector<9x128xf32>
    %72 = vector.broadcast %64 : vector<1x128xf32> to vector<9x128xf32>
    %73 = arith.mulf %72, %26 : vector<9x128xf32>
    %74 = arith.addf %71, %73 : vector<9x128xf32>
    %cst_15 = arith.constant 5.000000e-01 : f32
    %75 = vector.broadcast %cst_15 : f32 to vector<9x128xf32>
    %76 = arith.mulf %75, %69 : vector<9x128xf32>
    %cst_16 = arith.constant 0.707106769 : f32
    %77 = vector.broadcast %cst_16 : f32 to vector<9x128xf32>
    %78 = arith.mulf %69, %77 : vector<9x128xf32>
    %79 = math.erf %78 : vector<9x128xf32>
    %cst_17 = arith.constant 1.000000e+00 : f32
    %80 = vector.broadcast %cst_17 : f32 to vector<9x128xf32>
    %81 = arith.addf %80, %79 : vector<9x128xf32>
    %82 = arith.mulf %76, %81 : vector<9x128xf32>
    %cst_18 = arith.constant 5.000000e-01 : f32
    %83 = vector.broadcast %cst_18 : f32 to vector<9x128xf32>
    %84 = arith.mulf %83, %74 : vector<9x128xf32>
    %cst_19 = arith.constant 0.707106769 : f32
    %85 = vector.broadcast %cst_19 : f32 to vector<9x128xf32>
    %86 = arith.mulf %74, %85 : vector<9x128xf32>
    %87 = math.erf %86 : vector<9x128xf32>
    %cst_20 = arith.constant 1.000000e+00 : f32
    %88 = vector.broadcast %cst_20 : f32 to vector<9x128xf32>
    %89 = arith.addf %88, %87 : vector<9x128xf32>
    %90 = arith.mulf %84, %89 : vector<9x128xf32>
    %c0_21 = arith.constant 0 : index
    %c0_22 = arith.constant 0 : index
    %91 = vector.load %arg5[%c0_21, %c0_22] : memref<2x9xf32, #tpu.memory_space<vmem>>, vector<2x9xf32>
    %cst_23 = arith.constant dense<0.000000e+00> : vector<2x128xf32>
    %92 = tpu.matmul %91, %82, %cst_23 {dimension_numbers = #tpu.dot_dimension_numbers<[1], [0], [0], [1], [0, 0, 1, 1], [], []>} : vector<2x9xf32>, vector<9x128xf32>, vector<2x128xf32> -> vector<2x128xf32>
    %c0_24 = arith.constant 0 : index
    %c0_25 = arith.constant 0 : index
    %93 = vector.load %arg6[%c0_24, %c0_25] : memref<2x9xf32, #tpu.memory_space<vmem>>, vector<2x9xf32>
    %cst_26 = arith.constant dense<0.000000e+00> : vector<2x128xf32>
    %94 = tpu.matmul %93, %90, %cst_26 {dimension_numbers = #tpu.dot_dimension_numbers<[1], [0], [0], [1], [0, 0, 1, 1], [], []>} : vector<2x9xf32>, vector<9x128xf32>, vector<2x128xf32> -> vector<2x128xf32>
    %95 = arith.addf %92, %94 : vector<2x128xf32>
    %c0_27 = arith.constant 0 : index
    %c0_28 = arith.constant 0 : index
    %96 = vector.load %arg7[%c0_27, %c0_28] : memref<2x1xf32, #tpu.memory_space<vmem>>, vector<2x1xf32>
    %97 = vector.broadcast %96 : vector<2x1xf32> to vector<2x128xf32>
    %98 = arith.addf %95, %97 : vector<2x128xf32>
    %99 = vector.extract_strided_slice %98 {offsets = [0, 0], sizes = [1, 128], strides = [1, 1]} : vector<2x128xf32> to vector<1x128xf32>
    %100 = vector.extract_strided_slice %98 {offsets = [1, 0], sizes = [1, 128], strides = [1, 1]} : vector<2x128xf32> to vector<1x128xf32>
    %101 = arith.maximumf %99, %100 : vector<1x128xf32>
    %102 = arith.subf %99, %101 : vector<1x128xf32>
    %103 = math.exp %102 : vector<1x128xf32>
    %104 = arith.subf %100, %101 : vector<1x128xf32>
    %105 = math.exp %104 : vector<1x128xf32>
    %106 = arith.addf %103, %105 : vector<1x128xf32>
    %107 = tpu.reciprocal %106 {approx = true} : vector<1x128xf32> -> vector<1x128xf32>
    %108 = arith.mulf %103, %107 : vector<1x128xf32>
    %109 = arith.mulf %105, %107 : vector<1x128xf32>
    %110 = tpu.concatenate %108, %109 in 0 : vector<1x128xf32>, vector<1x128xf32> -> vector<2x128xf32>
    %c0_29 = arith.constant 0 : index
    %c0_30 = arith.constant 0 : index
    %111 = vector.load %arg8[%c0_29, %c0_30] : memref<2x128xf32, #tpu.memory_space<vmem>>, vector<2x128xf32>
    tpu.vector_store %arg8[%c0_29, %c0_30], %110 {strides = array<i32>} : memref<2x128xf32, #tpu.memory_space<vmem>>, vector<2x128xf32>,
    return
  }
  func.func @transform_0(%arg0: i32) -> (i32, i32) {
    %c0_i32 = arith.constant 0 : i32
    %c0_i32_0 = arith.constant 0 : i32
    return %arg0, %c0_i32 : i32, i32
  }
  func.func @transform_1(%arg0: i32) -> (i32, i32) {
    %c0_i32 = arith.constant 0 : i32
    %c0_i32_0 = arith.constant 0 : i32
    %c0_i32_1 = arith.constant 0 : i32
    return %c0_i32, %c0_i32_0 : i32, i32
  }
  func.func @transform_2(%arg0: i32) -> (i32, i32) {
    %c0_i32 = arith.constant 0 : i32
    %c0_i32_0 = arith.constant 0 : i32
    %c0_i32_1 = arith.constant 0 : i32
    return %c0_i32, %c0_i32_0 : i32, i32
  }
  func.func @transform_3(%arg0: i32) -> (i32, i32) {
    %c0_i32 = arith.constant 0 : i32
    %c0_i32_0 = arith.constant 0 : i32
    %c0_i32_1 = arith.constant 0 : i32
    return %c0_i32, %c0_i32_0 : i32, i32
  }
  func.func @transform_4(%arg0: i32) -> (i32, i32) {
    %c0_i32 = arith.constant 0 : i32
    %c0_i32_0 = arith.constant 0 : i32
    %c0_i32_1 = arith.constant 0 : i32
    return %c0_i32, %c0_i32_0 : i32, i32
  }
  func.func @transform_5(%arg0: i32) -> (i32, i32) {
    %c0_i32 = arith.constant 0 : i32
    %c0_i32_0 = arith.constant 0 : i32
    %c0_i32_1 = arith.constant 0 : i32
    return %c0_i32, %c0_i32_0 : i32, i32
  }
  func.func @transform_6(%arg0: i32) -> (i32, i32) {
    %c0_i32 = arith.constant 0 : i32
    %c0_i32_0 = arith.constant 0 : i32
    %c0_i32_1 = arith.constant 0 : i32
    return %c0_i32, %c0_i32_0 : i32, i32
  }
  func.func @transform_7(%arg0: i32) -> (i32, i32) {
    %c0_i32 = arith.constant 0 : i32
    %c0_i32_0 = arith.constant 0 : i32
    return %c0_i32, %arg0 : i32, i32
  }
}

</mosaic_0001>

<llo_original>
// kernel: transformer_forward.1
$region0: #{transformer_forward.1}
  #allocation0 [shape = 'u32[]', space=smem, size = 0x4, offset = 0x4, fixed_abs, tag = 'smem constant byte address 0x4 - core index']
  #allocation1 [shape = 'u32[144,128]{1,0:T(1,128)}', space=vmem, size = 0x12000, scoped, tag = 'internal scratch']
  %s0 = inlined_call_operand.vmem [shape: f32[256,82], index: 0, kind: input, shape index: {}]
  %s1 = inlined_call_operand.vmem [shape: f32[82,24], index: 1, kind: input, shape index: {}]
  %s2 = inlined_call_operand.vmem [shape: f32[24,1], index: 2, kind: input, shape index: {}]
  %s3 = inlined_call_operand.vmem [shape: f32[26,24], index: 3, kind: input, shape index: {}]
  %s4 = inlined_call_operand.vmem [shape: f32[2,9], index: 4, kind: input, shape index: {}]
  %s5 = inlined_call_operand.vmem [shape: f32[2,9], index: 5, kind: input, shape index: {}]
  %s6 = inlined_call_operand.vmem [shape: f32[2,1], index: 6, kind: input, shape index: {}]
  %s7 = inlined_call_operand.vmem [shape: f32[2,256], index: 7, kind: output, shape index: {}]
  %s8 = sld [smem:[#allocation0]]
  $region61: #{transformer_forward.1} parent=0
    _
  %s10 = ssub.s32 1, %s8
  %s11 = scalar_select 0, %s10, %s8
  loop: start=0, step=1, limit=4
  $region2: #{transformer_forward.1} parent=0 // loop_pre_header
    _
  $region3: #{transformer_forward.1} parent=0 // loop_header
    %s13 = sphi 0, %s17
    %p14 = scmp.ge.s32.totalorder %s13, 4
    %s23 = sphi 0, %s25
    %s26 = sphi 0, %s23
    %s27 = sphi 0, %s26
    %s43 = sphi 0, %s27
    %s47 = sphi 0, %s47
    %s49 = sphi 0, %s47
    %s50 = sphi 0, %s49
    %s64 = sphi 0, %s50
    %s68 = sphi 0, %s68
    %s70 = sphi 0, %s68
    %s71 = sphi 0, %s70
    %s85 = sphi 0, %s71
    %s89 = sphi 0, %s89
    %s91 = sphi 0, %s89
    %s92 = sphi 0, %s91
    %s106 = sphi 0, %s92
    %s110 = sphi 0, %s110
    %s112 = sphi 0, %s110
    %s113 = sphi 0, %s112
    %s127 = sphi 0, %s113
    %s131 = sphi 0, %s131
    %s133 = sphi 0, %s131
    %s134 = sphi 0, %s133
    %s148 = sphi 0, %s134
    %s152 = sphi 0, %s152
    %s154 = sphi 0, %s152
    %s155 = sphi 0, %s154
    %s169 = sphi 0, %s155
    %s175 = sphi 0, %s177
    %s178 = sphi 0, %s175
    %s179 = sphi 0, %s178
    %s195 = sphi 0, %s179
  $region4: #{transformer_forward.1} parent=0 // loop_header_branch
    %16 = sbr.rel (%p14) target = $region8
  $region5: #{transformer_forward.1} parent=0 // loop_body
    %s18 = ssub.s32 %s13, 1
    %s19 = ssub.s32 %s13, 2
    %s20 = sadd.s32 %s13, 1
    %s21 = ssub.s32 %s13, %s20
    %p22 = scmp.eq.s32.totalorder %s21, 0
    %s24 = sadd.s32 %s23, 1
    %s25 = scalar_select %p22, %s23, %s24
    %p28 = pneg %p22
    %p29 = scmp.eq.s32.totalorder %s13, 1
    %p30 = por %p28, %p29
    %p31 = scmp.ne.s32.totalorder %s23, %s26
    %p32 = scmp.eq.s32.totalorder %s13, 0
    %p33 = por %p31, %p32
    %p34 = scmp.ne.s32.totalorder %s23, %s26
    %p35 = scmp.eq.s32.totalorder %s18, 1
    %p36 = por %p34, %p35
    %p37 = scmp.ne.s32.totalorder %s26, %s27
    %p38 = scmp.eq.s32.totalorder %s18, 0
    %p39 = por %p37, %p38
    %p40 = scmp.ne.s32.totalorder %s26, %s27
    %p41 = scmp.eq.s32.totalorder %s19, 1
    %p42 = por %p40, %p41
    %p44 = scmp.ne.s32.totalorder %s27, %s43
    %p45 = scmp.eq.s32.totalorder %s19, 0
    %p46 = por %p44, %p45
    %s48 = sadd.s32 %s47, 1
    %p51 = scmp.eq.s32.totalorder %s13, 1
    %p52 = scmp.ne.s32.totalorder %s47, %s49
    %p53 = scmp.eq.s32.totalorder %s13, 0
    %p54 = por %p52, %p53
    %p55 = scmp.ne.s32.totalorder %s47, %s49
    %p56 = scmp.eq.s32.totalorder %s18, 1
    %p57 = por %p55, %p56
    %p58 = scmp.ne.s32.totalorder %s49, %s50
    %p59 = scmp.eq.s32.totalorder %s18, 0
    %p60 = por %p58, %p59
    %p61 = scmp.ne.s32.totalorder %s49, %s50
    %p62 = scmp.eq.s32.totalorder %s19, 1
    %p63 = por %p61, %p62
    %p65 = scmp.ne.s32.totalorder %s50, %s64
    %p66 = scmp.eq.s32.totalorder %s19, 0
    %p67 = por %p65, %p66
    %s69 = sadd.s32 %s68, 1
    %p72 = scmp.eq.s32.totalorder %s13, 1
    %p73 = scmp.ne.s32.totalorder %s68, %s70
    %p74 = scmp.eq.s32.totalorder %s13, 0
    %p75 = por %p73, %p74
    %p76 = scmp.ne.s32.totalorder %s68, %s70
    %p77 = scmp.eq.s32.totalorder %s18, 1
    %p78 = por %p76, %p77
    %p79 = scmp.ne.s32.totalorder %s70, %s71
    %p80 = scmp.eq.s32.totalorder %s18, 0
    %p81 = por %p79, %p80
    %p82 = scmp.ne.s32.totalorder %s70, %s71
    %p83 = scmp.eq.s32.totalorder %s19, 1
    %p84 = por %p82, %p83
    %p86 = scmp.ne.s32.totalorder %s71, %s85
    %p87 = scmp.eq.s32.totalorder %s19, 0
    %p88 = por %p86, %p87
    %s90 = sadd.s32 %s89, 1
    %p93 = scmp.eq.s32.totalorder %s13, 1
    %p94 = scmp.ne.s32.totalorder %s89, %s91
    %p95 = scmp.eq.s32.totalorder %s13, 0
    %p96 = por %p94, %p95
    %p97 = scmp.ne.s32.totalorder %s89, %s91
    %p98 = scmp.eq.s32.totalorder %s18, 1
    %p99 = por %p97, %p98
    %p100 = scmp.ne.s32.totalorder %s91, %s92
    %p101 = scmp.eq.s32.totalorder %s18, 0
    %p102 = por %p100, %p101
    %p103 = scmp.ne.s32.totalorder %s91, %s92
    %p104 = scmp.eq.s32.totalorder %s19, 1
    %p105 = por %p103, %p104
    %p107 = scmp.ne.s32.totalorder %s92, %s106
    %p108 = scmp.eq.s32.totalorder %s19, 0
    %p109 = por %p107, %p108
    %s111 = sadd.s32 %s110, 1
    %p114 = scmp.eq.s32.totalorder %s13, 1
    %p115 = scmp.ne.s32.totalorder %s110, %s112
    %p116 = scmp.eq.s32.totalorder %s13, 0
    %p117 = por %p115, %p116
    %p118 = scmp.ne.s32.totalorder %s110, %s112
    %p119 = scmp.eq.s32.totalorder %s18, 1
    %p120 = por %p118, %p119
    %p121 = scmp.ne.s32.totalorder %s112, %s113
    %p122 = scmp.eq.s32.totalorder %s18, 0
    %p123 = por %p121, %p122
    %p124 = scmp.ne.s32.totalorder %s112, %s113
    %p125 = scmp.eq.s32.totalorder %s19, 1
    %p126 = por %p124, %p125
    %p128 = scmp.ne.s32.totalorder %s113, %s127
    %p129 = scmp.eq.s32.totalorder %s19, 0
    %p130 = por %p128, %p129
    %s132 = sadd.s32 %s131, 1
    %p135 = scmp.eq.s32.totalorder %s13, 1
    %p136 = scmp.ne.s32.totalorder %s131, %s133
    %p137 = scmp.eq.s32.totalorder %s13, 0
    %p138 = por %p136, %p137
    %p139 = scmp.ne.s32.totalorder %s131, %s133
    %p140 = scmp.eq.s32.totalorder %s18, 1
    %p141 = por %p139, %p140
    %p142 = scmp.ne.s32.totalorder %s133, %s134
    %p143 = scmp.eq.s32.totalorder %s18, 0
    %p144 = por %p142, %p143
    %p145 = scmp.ne.s32.totalorder %s133, %s134
    %p146 = scmp.eq.s32.totalorder %s19, 1
    %p147 = por %p145, %p146
    %p149 = scmp.ne.s32.totalorder %s134, %s148
    %p150 = scmp.eq.s32.totalorder %s19, 0
    %p151 = por %p149, %p150
    %s153 = sadd.s32 %s152, 1
    %p156 = scmp.eq.s32.totalorder %s13, 1
    %p157 = scmp.ne.s32.totalorder %s152, %s154
    %p158 = scmp.eq.s32.totalorder %s13, 0
    %p159 = por %p157, %p158
    %p160 = scmp.ne.s32.totalorder %s152, %s154
    %p161 = scmp.eq.s32.totalorder %s18, 1
    %p162 = por %p160, %p161
    %p163 = scmp.ne.s32.totalorder %s154, %s155
    %p164 = scmp.eq.s32.totalorder %s18, 0
    %p165 = por %p163, %p164
    %p166 = scmp.ne.s32.totalorder %s154, %s155
    %p167 = scmp.eq.s32.totalorder %s19, 1
    %p168 = por %p166, %p167
    %p170 = scmp.ne.s32.totalorder %s155, %s169
    %p171 = scmp.eq.s32.totalorder %s19, 0
    %p172 = por %p170, %p171
    %s173 = ssub.s32 %s13, %s20
    %p174 = scmp.eq.s32.totalorder %s173, 0
    %s176 = sadd.s32 %s175, 1
    %s177 = scalar_select %p174, %s175, %s176
    %p180 = pneg %p174
    %p181 = scmp.eq.s32.totalorder %s13, 1
    %p182 = por %p180, %p181
    %p183 = scmp.ne.s32.totalorder %s175, %s178
    %p184 = scmp.eq.s32.totalorder %s13, 0
    %p185 = por %p183, %p184
    %p186 = scmp.ne.s32.totalorder %s175, %s178
    %p187 = scmp.eq.s32.totalorder %s18, 1
    %p188 = por %p186, %p187
    %p189 = scmp.ne.s32.totalorder %s178, %s179
    %p190 = scmp.eq.s32.totalorder %s18, 0
    %p191 = por %p189, %p190
    %p192 = scmp.ne.s32.totalorder %s178, %s179
    %p193 = scmp.eq.s32.totalorder %s19, 1
    %p194 = por %p192, %p193
    %p196 = scmp.ne.s32.totalorder %s179, %s195
    %p197 = scmp.eq.s32.totalorder %s19, 0
    %p198 = por %p196, %p197
    %p199 = scmp.le.s32.totalorder 1, %s13
    %p200 = scmp.lt.s32.totalorder %s13, 3
    %p201 = pnand %p199, %p200
    %p202 = pneg %p201
    // Predicated region
    $region9: #{transformer_forward.1} parent=5 // pred_check
      _
    $region10: #{transformer_forward.1} parent=5 // pred_check_branch
      %204 = sbr.rel (%p201) target = $region12
    $region11: #{transformer_forward.1} parent=5 // pred_region
      %s205 = ssub.s32 %s13, 1
      // Predicated region
      $region13: #{transformer_forward.1} parent=11 // pred_check
        %p206 = pneg %p60
      $region14: #{transformer_forward.1} parent=11 // pred_check_branch
        %208 = sbr.rel (%p206) target = $region16
      $region15: #{transformer_forward.1} parent=11 // pred_region
        _
      $region16: #{transformer_forward.1} parent=11 // pred_fallthru
        _
      // Predicated region
      $region17: #{transformer_forward.1} parent=11 // pred_check
        %p209 = pneg %p81
      $region18: #{transformer_forward.1} parent=11 // pred_check_branch
        %211 = sbr.rel (%p209) target = $region20
      $region19: #{transformer_forward.1} parent=11 // pred_region
        _
      $region20: #{transformer_forward.1} parent=11 // pred_fallthru
        _
      // Predicated region
      $region21: #{transformer_forward.1} parent=11 // pred_check
        %p212 = pneg %p102
      $region22: #{transformer_forward.1} parent=11 // pred_check_branch
        %214 = sbr.rel (%p212) target = $region24
      $region23: #{transformer_forward.1} parent=11 // pred_region
        _
      $region24: #{transformer_forward.1} parent=11 // pred_fallthru
        _
      // Predicated region
      $region25: #{transformer_forward.1} parent=11 // pred_check
        %p215 = pneg %p123
      $region26: #{transformer_forward.1} parent=11 // pred_check_branch
        %217 = sbr.rel (%p215) target = $region28
      $region27: #{transformer_forward.1} parent=11 // pred_region
        _
      $region28: #{transformer_forward.1} parent=11 // pred_fallthru
        _
      // Predicated region
      $region29: #{transformer_forward.1} parent=11 // pred_check
        %p218 = pneg %p144
      $region30: #{transformer_forward.1} parent=11 // pred_check_branch
        %220 = sbr.rel (%p218) target = $region32
      $region31: #{transformer_forward.1} parent=11 // pred_region
        _
      $region32: #{transformer_forward.1} parent=11 // pred_fallthru
        _
      // Predicated region
      $region33: #{transformer_forward.1} parent=11 // pred_check
        %p221 = pneg %p165
      $region34: #{transformer_forward.1} parent=11 // pred_check_branch
        %223 = sbr.rel (%p221) target = $region36
      $region35: #{transformer_forward.1} parent=11 // pred_region
        _
      $region36: #{transformer_forward.1} parent=11 // pred_fallthru
        _
    $region12: #{transformer_forward.1} parent=5 // pred_fallthru
      _
    %p224 = scmp.lt.s32.totalorder %s13, 2
    // Predicated region
    $region37: #{transformer_forward.1} parent=5 // pred_check
      %p225 = pneg %p224
    $region38: #{transformer_forward.1} parent=5 // pred_check_branch
      %227 = sbr.rel (%p225) target = $region40
    $region39: #{transformer_forward.1} parent=5 // pred_region
      // Predicated region
      $region41: #{transformer_forward.1} parent=39 // pred_check
        %p228 = pneg %p33
      $region42: #{transformer_forward.1} parent=39 // pred_check_branch
        %230 = sbr.rel (%p228) target = $region44
      $region43: #{transformer_forward.1} parent=39 // pred_region
        %s231 = smul.u32 16, %s13
        %p232 = scmp.lt.s32.totalorder %s231, 31
        %s233 = scalar_select %p232, %s231, 31
        %s234 = smul.addr %s233, 8
        %s235 = scalar_lea.vmem %s0, %s234
        %s236 = smul.u32 16, %s13
      $region44: #{transformer_forward.1} parent=39 // pred_fallthru
        _
    $region40: #{transformer_forward.1} parent=5 // pred_fallthru
      _
    %p237 = scmp.le.s32.totalorder 1, %s13
    %p238 = scmp.lt.s32.totalorder %s13, 3
    %p239 = pnand %p237, %p238
    %p240 = pneg %p239
    // Predicated region
    $region45: #{transformer_forward.1} parent=5 // pred_check
      _
    $region46: #{transformer_forward.1} parent=5 // pred_check_branch
      %242 = sbr.rel (%p239) target = $region48
    $region47: #{transformer_forward.1} parent=5 // pred_region
      %s243 = ssub.s32 %s13, 1
      %s244 = smul.u32 16, %s18
      %p245 = scmp.lt.s32.totalorder %s244, 31
      %s246 = scalar_select %p245, %s244, 31
      %s247 = smul.addr %s246, 8
      %s248 = scalar_lea.vmem %s0, %s247
      %p249 = pneg %p39
      %p250 = pneg %p36
      %p251 = pneg %p60
      %p252 = pneg %p57
      %p253 = pneg %p81
      %p254 = pneg %p78
      %p255 = pneg %p102
      %p256 = pneg %p99
      %p257 = pneg %p123
      %p258 = pneg %p120
      %p259 = pneg %p144
      %p260 = pneg %p141
      %p261 = pneg %p165
      %p262 = pneg %p162
      %p263 = pneg %p191
      %p264 = pneg %p188
      %p265 = scmp.lt.s32.totalorder %s18, 1
      %s266 = scalar_select %p265, %s18, 1
      %s267 = smul.addr %s266, 2
      %s268 = scalar_lea.vmem %s7, %s267
      %s269 = smul.u32 16, %s18
      %p270 = scmp.lt.s32.totalorder %s269, 31
      %s271 = scalar_select %p270, %s269, 31
      %s272 = smul.addr %s271, 8
      %s273 = scalar_lea.vmem %s0, %s272
      %s274 = smul.u32 16, %s18
      %p275 = scmp.lt.s32.totalorder %s18, 1
      %s276 = scalar_select %p275, %s18, 1
      %s277 = smul.addr %s276, 2
      %s278 = scalar_lea.vmem %s7, %s277
      %v279 = vld [vmem:[%s273] sm:$0xff]
      %v280 = vld [vmem:[%s273 + $0x8] sm:$0xff]
      %v281 = vld [vmem:[%s273 + $0x10] sm:$0xff]
      %v282 = vld [vmem:[%s273 + $0x18] sm:$0xff]
      %v283 = vld [vmem:[%s273 + $0x20] sm:$0xff]
      %v284 = vld [vmem:[%s273 + $0x28] sm:$0xff]
      %v285 = vld [vmem:[%s273 + $0x30] sm:$0xff]
      %v286 = vld [vmem:[%s273 + $0x38] sm:$0xff]
      %v287 = vld [vmem:[%s273 + $0x40] sm:$0xff]
      %v288 = vld [vmem:[%s273 + $0x48] sm:$0xff]
      %v289 = vld [vmem:[%s273 + $0x50] sm:$0xff]
      %v290 = vld [vmem:[%s273 + $0x58] sm:$0xff]
      %v291 = vld [vmem:[%s273 + $0x60] sm:$0xff]
      %v292 = vld [vmem:[%s273 + $0x68] sm:$0xff]
      %v293 = vld [vmem:[%s273 + $0x70] sm:$0xff]
      %v294 = vld [vmem:[%s273 + $0x78] sm:$0xff]
      %v295 = vld [vmem:[%s1] sm:$0xff]
      %v296 = vld [vmem:[%s1 + $0x8] sm:$0xff]
      %v297 = vld [vmem:[%s1 + $0x10] sm:$0xff]
      %v298 = vld [vmem:[%s1 + $0x18] sm:$0xff]
      %v299 = vld [vmem:[%s1 + $0x20] sm:$0xff]
      %v300 = vld [vmem:[%s1 + $0x28] sm:$0xff]
      %v301 = vld [vmem:[%s1 + $0x30] sm:$0xff]
      %v302 = vld [vmem:[%s1 + $0x38] sm:$0xff]
      %v303 = vld [vmem:[%s1 + $0x40] sm:$0xff]
      %v304 = vld [vmem:[%s1 + $0x48] sm:$0xff]
      %v305 = vld [vmem:[%s1 + $0x50] sm:$0x3]
      %vm306 = vcmask 670720
      %v308 = vsel %vm306, %v279, 0
      %v311 = vsel %vm306, %v280, 0
      %v314 = vsel %vm306, %v281, 0
      %v317 = vsel %vm306, %v282, 0
      %v320 = vsel %vm306, %v283, 0
      %v323 = vsel %vm306, %v284, 0
      %v326 = vsel %vm306, %v285, 0
      %v329 = vsel %vm306, %v286, 0
      %v332 = vsel %vm306, %v287, 0
      %v335 = vsel %vm306, %v288, 0
      %v338 = vsel %vm306, %v289, 0
      %v341 = vsel %vm306, %v290, 0
      %v344 = vsel %vm306, %v291, 0
      %v347 = vsel %vm306, %v292, 0
      %v350 = vsel %vm306, %v293, 0
      %v353 = vsel %vm306, %v294, 0
      %vm355 = vcmask 1041408
      %v357 = vsel %vm355, %v305, 0
      %359 = vmatprep.subr.mxu0 0.0
      %360 = vmatpush1.msra.mxu0 %v295
      %361 = vmatprep.subr.mxu0 0.0
      %362 = vmatpush1.msra.mxu0 %v296
      %363 = vmatprep.subr.mxu0 0.0
      %364 = vmatpush1.msra.mxu0 %v297
      %365 = vmatprep.subr.mxu0 0.0
      %366 = vmatpush1.msra.mxu0 %v298
      %367 = vmatprep.subr.mxu0 0.0
      %368 = vmatpush1.msra.mxu0 %v299
      %369 = vmatprep.subr.mxu0 0.0
      %370 = vmatpush1.msra.mxu0 %v300
      %371 = vmatprep.subr.mxu0 0.0
      %372 = vmatpush1.msra.mxu0 %v301
      %373 = vmatprep.subr.mxu0 0.0
      %374 = vmatpush1.msra.mxu0 %v302
      %375 = vmatprep.subr.mxu0 0.0
      %376 = vmatpush1.msra.mxu0 %v303
      %377 = vmatprep.subr.mxu0 0.0
      %378 = vmatpush1.msra.mxu0 %v304
      %379 = vmatprep.subr.mxu0 0.0
      %380 = vmatpush1.msra.mxu0 %v357
      %381 = vmatprep.subr.mxu0 0.0
      %382 = vmatpush1.msra.mxu0 0.0
      %383 = vmatprep.subr.mxu0 0.0
      %384 = vmatpush1.msra.mxu0 0.0
      %385 = vmatprep.subr.mxu0 0.0
      %386 = vmatpush1.msra.mxu0 0.0
      %387 = vmatprep.subr.mxu0 0.0
      %388 = vmatpush1.msra.mxu0 0.0
      %389 = vmatprep.subr.mxu0 0.0
      %390 = vmatpush1.msra.mxu0 0.0
      %391 = vmatprep.subr.mxu0 0.0
      %392 = vmatpush1.msra.mxu0 0.0
      %393 = vmatprep.subr.mxu0 0.0
      %394 = vmatpush1.msra.mxu0 0.0
      %395 = vmatprep.subr.mxu0 0.0
      %396 = vmatpush1.msra.mxu0 0.0
      %397 = vmatprep.subr.mxu0 0.0
      %398 = vmatpush1.msra.mxu0 0.0
      %399 = vmatprep.subr.mxu0 0.0
      %400 = vmatpush1.msra.mxu0 0.0
      %401 = vmatprep.subr.mxu0 0.0
      %402 = vmatpush1.msra.mxu0 0.0
      %403 = vmatprep.subr.mxu0 0.0
      %404 = vmatpush1.msra.mxu0 0.0
      %405 = vmatprep.subr.mxu0 0.0
      %406 = vmatpush1.msra.mxu0 0.0
      %407 = vmatprep.subr.mxu0 0.0
      %408 = vmatpush1.msra.mxu0 0.0
      %409 = vmatprep.subr.mxu0 0.0
      %410 = vmatpush1.msra.mxu0 0.0
      %411 = vmatprep.subr.mxu0 0.0
      %412 = vmatpush1.msra.mxu0 0.0
      %413 = vmatprep.subr.mxu0 0.0
      %414 = vmatpush1.msra.mxu0 0.0
      %415 = vmatprep.subr.mxu0 0.0
      %416 = vmatpush1.msra.mxu0 0.0
      %417 = vmatprep.subr.mxu0 0.0
      %418 = vmatpush1.msra.mxu0 0.0
      %419 = vmatprep.subr.mxu0 0.0
      %420 = vmatpush1.msra.mxu0 0.0
      %421 = vmatprep.subr.mxu0 0.0
      %422 = vmatpush1.msra.mxu0 0.0
      %423 = vmatprep.mubr.f32.mxu0 0.0
      %424 = vmatmul.mubr.f32.gmra.mrb[0].mxu0 %v308
      %v425 = vpop.f32.mrb[0].mxu0
      %v426 = vadd.f32 0.0, %v425
      %v427 = vpop.f32.mrb[0].mxu0
      %428 = vmatprep.mubr.f32.mxu0 0.0
      %429 = vmatmul.mubr.f32.gmra.mrb[0].mxu0 %v311
      %v430 = vpop.f32.mrb[0].mxu0
      %v431 = vadd.f32 0.0, %v430
      %v432 = vpop.f32.mrb[0].mxu0
      %433 = vmatprep.mubr.f32.mxu0 0.0
      %434 = vmatmul.mubr.f32.gmra.mrb[0].mxu0 %v314
      %v435 = vpop.f32.mrb[0].mxu0
      %v436 = vadd.f32 0.0, %v435
      %v437 = vpop.f32.mrb[0].mxu0
      %438 = vmatprep.mubr.f32.mxu0 0.0
      %439 = vmatmul.mubr.f32.gmra.mrb[0].mxu0 %v317
      %v440 = vpop.f32.mrb[0].mxu0
      %v441 = vadd.f32 0.0, %v440
      %v442 = vpop.f32.mrb[0].mxu0
      %443 = vmatprep.mubr.f32.mxu0 0.0
      %444 = vmatmul.mubr.f32.gmra.mrb[0].mxu0 %v320
      %v445 = vpop.f32.mrb[0].mxu0
      %v446 = vadd.f32 0.0, %v445
      %v447 = vpop.f32.mrb[0].mxu0
      %448 = vmatprep.mubr.f32.mxu0 0.0
      %449 = vmatmul.mubr.f32.gmra.mrb[0].mxu0 %v323
      %v450 = vpop.f32.mrb[0].mxu0
      %v451 = vadd.f32 0.0, %v450
      %v452 = vpop.f32.mrb[0].mxu0
      %453 = vmatprep.mubr.f32.mxu0 0.0
      %454 = vmatmul.mubr.f32.gmra.mrb[0].mxu0 %v326
      %v455 = vpop.f32.mrb[0].mxu0
      %v456 = vadd.f32 0.0, %v455
      %v457 = vpop.f32.mrb[0].mxu0
      %458 = vmatprep.mubr.f32.mxu0 0.0
      %459 = vmatmul.mubr.f32.gmra.mrb[0].mxu0 %v329
      %v460 = vpop.f32.mrb[0].mxu0
      %v461 = vadd.f32 0.0, %v460
      %v462 = vpop.f32.mrb[0].mxu0
      %463 = vmatprep.mubr.f32.mxu0 0.0
      %464 = vmatmul.mubr.f32.gmra.mrb[0].mxu0 %v332
      %v465 = vpop.f32.mrb[0].mxu0
      %v466 = vadd.f32 0.0, %v465
      %v467 = vpop.f32.mrb[0].mxu0
      %468 = vmatprep.mubr.f32.mxu0 0.0
      %469 = vmatmul.mubr.f32.gmra.mrb[0].mxu0 %v335
      %v470 = vpop.f32.mrb[0].mxu0
      %v471 = vadd.f32 0.0, %v470
      %v472 = vpop.f32.mrb[0].mxu0
      %473 = vmatprep.mubr.f32.mxu0 0.0
      %474 = vmatmul.mubr.f32.gmra.mrb[0].mxu0 %v338
      %v475 = vpop.f32.mrb[0].mxu0
      %v476 = vadd.f32 0.0, %v475
      %v477 = vpop.f32.mrb[0].mxu0
      %478 = vmatprep.mubr.f32.mxu0 0.0
      %479 = vmatmul.mubr.f32.gmra.mrb[0].mxu0 %v341
      %v480 = vpop.f32.mrb[0].mxu0
      %v481 = vadd.f32 0.0, %v480
      %v482 = vpop.f32.mrb[0].mxu0
      %483 = vmatprep.mubr.f32.mxu0 0.0
      %484 = vmatmul.mubr.f32.gmra.mrb[0].mxu0 %v344
      %v485 = vpop.f32.mrb[0].mxu0
      %v486 = vadd.f32 0.0, %v485
      %v487 = vpop.f32.mrb[0].mxu0
      %488 = vmatprep.mubr.f32.mxu0 0.0
      %489 = vmatmul.mubr.f32.gmra.mrb[0].mxu0 %v347
      %v490 = vpop.f32.mrb[0].mxu0
      %v491 = vadd.f32 0.0, %v490
      %v492 = vpop.f32.mrb[0].mxu0
      %493 = vmatprep.mubr.f32.mxu0 0.0
      %494 = vmatmul.mubr.f32.gmra.mrb[0].mxu0 %v350
      %v495 = vpop.f32.mrb[0].mxu0
      %v496 = vadd.f32 0.0, %v495
      %v497 = vpop.f32.mrb[0].mxu0
      %498 = vmatprep.mubr.f32.mxu0 0.0
      %499 = vmatmul.mubr.f32.gmra.mrb[0].mxu0 %v353
      %v500 = vpop.f32.mrb[0].mxu0
      %v501 = vadd.f32 0.0, %v500
      %v502 = vpop.f32.mrb[0].mxu0
      %503 = vdwg.mxu0
      %504 = vxpose.xlu0.b32.start [1/16] %v426, 128
      %505 = vxpose.xlu0.b32.cont [2/16] %v431, 128
      %506 = vxpose.xlu0.b32.cont [3/16] %v436, 128
      %507 = vxpose.xlu0.b32.cont [4/16] %v441, 128
      %508 = vxpose.xlu0.b32.cont [5/16] %v446, 128
      %509 = vxpose.xlu0.b32.cont [6/16] %v451, 128
      %510 = vxpose.xlu0.b32.cont [7/16] %v456, 128
      %511 = vxpose.xlu0.b32.cont [8/16] %v461, 128
      %512 = vxpose.xlu0.b32.cont [9/16] %v466, 128
      %513 = vxpose.xlu0.b32.cont [10/16] %v471, 128
      %514 = vxpose.xlu0.b32.cont [11/16] %v476, 128
      %515 = vxpose.xlu0.b32.cont [12/16] %v481, 128
      %516 = vxpose.xlu0.b32.cont [13/16] %v486, 128
      %517 = vxpose.xlu0.b32.cont [14/16] %v491, 128
      %518 = vxpose.xlu0.b32.cont [15/16] %v496, 128
      %519 = vxpose.xlu0.b32.end [16/16] %v501, 128
      %v520 = vpop.trf.xlu0
      %v521 = vpop.trf.xlu0
      %v522 = vpop.trf.xlu0
      %v523 = vpop.trf.xlu0
      %v524 = vpop.trf.xlu0
      %v525 = vpop.trf.xlu0
      %v526 = vpop.trf.xlu0
      %v527 = vpop.trf.xlu0
      %v528 = vpop.trf.xlu0
      %v529 = vpop.trf.xlu0
      %v530 = vpop.trf.xlu0
      %v531 = vpop.trf.xlu0
      %v532 = vpop.trf.xlu0
      %v533 = vpop.trf.xlu0
      %v534 = vpop.trf.xlu0
      %v535 = vpop.trf.xlu0
      %v536 = vld [vmem:[%s2] sm:$0xff]
      %v537 = vld [vmem:[%s2 + $0x8] sm:$0xff]
      %v538 = vld [vmem:[%s2 + $0x10] sm:$0xff]
      %540 = vset.pattern.permute.xlu0 0
      %541 = vperm.xlu0 %540, %v536
      %v542 = vpop.permute.xlu0 %541
      %545 = vset.pattern.permute.xlu0 0
      %546 = vperm.xlu0 %545, %v537
      %v547 = vpop.permute.xlu0 %546
      %550 = vset.pattern.permute.xlu0 0
      %551 = vperm.xlu0 %550, %v538
      %v552 = vpop.permute.xlu0 %551
      %v554 = vadd.f32 %v520, %v542
      %v555 = vadd.f32 %v521, %v547
      %v556 = vadd.f32 %v522, %v552
      %v557 = vmul.f32 %v554, 0.5
      %v558 = vmul.f32 %v555, 0.5
      %v559 = vmul.f32 %v556, 0.5
      %v560 = vmul.f32 %v554, 0.70710677
      %v561 = vmul.f32 %v555, 0.70710677
      %v562 = vmul.f32 %v556, 0.70710677
      %v563 = verf.f32.pop %v560
      %v564 = verf.f32.pop %v561
      %v565 = verf.f32.pop %v562
      %v566 = vadd.f32 %v563, 1.0
      %v567 = vadd.f32 %v564, 1.0
      %v568 = vadd.f32 %v565, 1.0
      %v569 = vmul.f32 %v557, %v566
      %v570 = vmul.f32 %v558, %v567
      %v571 = vmul.f32 %v559, %v568
      %v572 = vld [vmem:[%s3] sm:$0xff]
      %v573 = vld [vmem:[%s3 + $0x8] sm:$0xff]
      %v574 = vld [vmem:[%s3 + $0x10] sm:$0xff]
      %v575 = vld [vmem:[%s3 + $0x18] sm:$0x3]
      %vm576 = vcmask 195584
      %v578 = vsel %vm576, %v572, 0
      %v581 = vsel %vm576, %v573, 0
      %v584 = vsel %vm576, %v574, 0
      %v587 = vsel %vm576, %v575, 0
      %589 = vmatprep.subr.mxu0 0.0
      %590 = vmatpush1.msra.mxu0 %v569
      %591 = vmatprep.subr.mxu0 0.0
      %592 = vmatpush1.msra.mxu0 %v570
      %593 = vmatprep.subr.mxu0 0.0
      %594 = vmatpush1.msra.mxu0 %v571
      %595 = vmatprep.subr.mxu0 0.0
      %596 = vmatpush1.msra.mxu0 0.0
      %597 = vmatprep.subr.mxu0 0.0
      %598 = vmatpush1.msra.mxu0 0.0
      %599 = vmatprep.subr.mxu0 0.0
      %600 = vmatpush1.msra.mxu0 0.0
      %601 = vmatprep.subr.mxu0 0.0
      %602 = vmatpush1.msra.mxu0 0.0
      %603 = vmatprep.subr.mxu0 0.0
      %604 = vmatpush1.msra.mxu0 0.0
      %605 = vmatprep.subr.mxu0 0.0
      %606 = vmatpush1.msra.mxu0 0.0
      %607 = vmatprep.subr.mxu0 0.0
      %608 = vmatpush1.msra.mxu0 0.0
      %609 = vmatprep.subr.mxu0 0.0
      %610 = vmatpush1.msra.mxu0 0.0
      %611 = vmatprep.subr.mxu0 0.0
      %612 = vmatpush1.msra.mxu0 0.0
      %613 = vmatprep.subr.mxu0 0.0
      %614 = vmatpush1.msra.mxu0 0.0
      %615 = vmatprep.subr.mxu0 0.0
      %616 = vmatpush1.msra.mxu0 0.0
      %617 = vmatprep.subr.mxu0 0.0
      %618 = vmatpush1.msra.mxu0 0.0
      %619 = vmatprep.subr.mxu0 0.0
      %620 = vmatpush1.msra.mxu0 0.0
      %621 = vmatprep.subr.mxu0 0.0
      %622 = vmatpush1.msra.mxu0 0.0
      %623 = vmatprep.subr.mxu0 0.0
      %624 = vmatpush1.msra.mxu0 0.0
      %625 = vmatprep.subr.mxu0 0.0
      %626 = vmatpush1.msra.mxu0 0.0
      %627 = vmatprep.subr.mxu0 0.0
      %628 = vmatpush1.msra.mxu0 0.0
      %629 = vmatprep.subr.mxu0 0.0
      %630 = vmatpush1.msra.mxu0 0.0
      %631 = vmatprep.subr.mxu0 0.0
      %632 = vmatpush1.msra.mxu0 0.0
      %633 = vmatprep.subr.mxu0 0.0
      %634 = vmatpush1.msra.mxu0 0.0
      %635 = vmatprep.subr.mxu0 0.0
      %636 = vmatpush1.msra.mxu0 0.0
      %637 = vmatprep.subr.mxu0 0.0
      %638 = vmatpush1.msra.mxu0 0.0
      %639 = vmatprep.subr.mxu0 0.0
      %640 = vmatpush1.msra.mxu0 0.0
      %641 = vmatprep.subr.mxu0 0.0
      %642 = vmatpush1.msra.mxu0 0.0
      %643 = vmatprep.subr.mxu0 0.0
      %644 = vmatpush1.msra.mxu0 0.0
      %645 = vmatprep.subr.mxu0 0.0
      %646 = vmatpush1.msra.mxu0 0.0
      %647 = vmatprep.subr.mxu0 0.0
      %648 = vmatpush1.msra.mxu0 0.0
      %649 = vmatprep.subr.mxu0 0.0
      %650 = vmatpush1.msra.mxu0 0.0
      %651 = vmatprep.subr.mxu0 0.0
      %652 = vmatpush1.msra.mxu0 0.0
      %653 = vmatprep.mubr.f32.mxu0 0.0
      %654 = vmatmul.mubr.f32.gmra.mrb[0].mxu0 %v578
      %v655 = vpop.f32.mrb[0].mxu0
      %v656 = vadd.f32 0.0, %v655
      %v657 = vpop.f32.mrb[0].mxu0
      %658 = vmatprep.mubr.f32.mxu0 0.0
      %659 = vmatmul.mubr.f32.gmra.mrb[0].mxu0 %v581
      %v660 = vpop.f32.mrb[0].mxu0
      %v661 = vadd.f32 0.0, %v660
      %v662 = vpop.f32.mrb[0].mxu0
      %663 = vmatprep.mubr.f32.mxu0 0.0
      %664 = vmatmul.mubr.f32.gmra.mrb[0].mxu0 %v584
      %v665 = vpop.f32.mrb[0].mxu0
      %v666 = vadd.f32 0.0, %v665
      %v667 = vpop.f32.mrb[0].mxu0
      %668 = vmatprep.mubr.f32.mxu0 0.0
      %669 = vmatmul.mubr.f32.gmra.mrb[0].mxu0 %v587
      %v670 = vpop.f32.mrb[0].mxu0
      %v671 = vadd.f32 0.0, %v670
      %v672 = vpop.f32.mrb[0].mxu0
      %673 = vdwg.mxu0
      %v675 = vrot.slane %v656, 4
      %v677 = vmul.f32 %v656, %v675
      %v679 = vrot.slane %v677, 1
      %v681 = vadd.f32 %v677, %v679
      %v682 = vmul.f32 %v681, 0.70710677
      %v683 = vrot.slane %v656, 6
      %v685 = vmul.f32 %v656, %v683
      %v687 = vrot.slane %v685, 1
      %v689 = vadd.f32 %v685, %v687
      %v690 = vmul.f32 %v689, 0.70710677
      %v691 = vrot.slane %v656, 2
      %v693 = vmul.f32 %v656, %v691
      %v695 = vrot.slane %v693, 1
      %v697 = vadd.f32 %v693, %v695
      %v698 = vmul.f32 %v697, 0.70710677
      %v699 = vmax.f32 %v682, %v690
      %v700 = vsub.f32 %v682, %v699
      %v701 = vmul.f32 %v700, 1.442695
      %v702 = vpow.pop %v701
      %v703 = vsub.f32 %v690, %v699
      %v704 = vmul.f32 %v703, 1.442695
      %v705 = vpow.pop %v704
      %v706 = vadd.f32 %v702, %v705
      %v707 = vrcp.pop %v706
      %v708 = vmul.f32 %v702, %v707
      %v709 = vmul.f32 %v705, %v707
      %v710 = vmax.f32 %v698, %v682
      %v711 = vsub.f32 %v698, %v710
      %v712 = vmul.f32 %v711, 1.442695
      %v713 = vpow.pop %v712
      %v714 = vsub.f32 %v682, %v710
      %v715 = vmul.f32 %v714, 1.442695
      %v716 = vpow.pop %v715
      %v717 = vadd.f32 %v713, %v716
      %v718 = vrcp.pop %v717
      %v719 = vmul.f32 %v713, %v718
      %v720 = vmul.f32 %v716, %v718
      %v721 = vlaneseq
      %v722 = vshrl.u32 %v721, 7
      %v723 = vsub.s32 0, %v722
      %v724 = vrot.slane %v708, %v723
      %v725 = vmul.f32 %v724, %v661
      %v726 = vmul.f32 %v724, %v666
      %v727 = vlaneseq
      %v728 = vshrl.u32 %v727, 7
      %v729 = vsub.s32 0, %v728
      %v730 = vrot.slane %v709, %v729
      %v731 = vmul.f32 %v730, %v666
      %v732 = vmul.f32 %v730, %v671
      %vm735 = vcmask 1046528
      %v736 = vrot.slane %v731, 1
      %v737 = vrot.slane %v732, 1
      %v738 = vsel %vm735, %v736, %v737
      %v741 = vadd.f32 %v725, %v738
      %v742 = vadd.f32 %v726, %v737
      %v743 = vlaneseq
      %v744 = vshrl.u32 %v743, 7
      %v745 = vsub.s32 2, %v744
      %v746 = vrot.slane %v719, %v745
      %v747 = vmul.f32 %v746, %v661
      %v748 = vmul.f32 %v746, %v666
      %v749 = vlaneseq
      %v750 = vshrl.u32 %v749, 7
      %v751 = vsub.s32 2, %v750
      %v752 = vrot.slane %v720, %v751
      %v753 = vmul.f32 %v752, %v666
      %v754 = vmul.f32 %v752, %v671
      %v757 = vrot.slane %v753, 1
      %v758 = vrot.slane %v754, 1
      %v759 = vsel %vm735, %v757, %v758
      %v762 = vadd.f32 %v747, %v759
      %v763 = vadd.f32 %v748, %v758
      %v764 = vmul.f32 %v741, 0.5
      %v765 = vmul.f32 %v742, 0.5
      %v766 = vmul.f32 %v741, 0.70710677
      %v767 = vmul.f32 %v742, 0.70710677
      %v768 = verf.f32.pop %v766
      %v769 = verf.f32.pop %v767
      %v770 = vadd.f32 %v768, 1.0
      %v771 = vadd.f32 %v769, 1.0
      %v772 = vmul.f32 %v764, %v770
      %v773 = vmul.f32 %v765, %v771
      %v774 = vmul.f32 %v762, 0.5
      %v775 = vmul.f32 %v763, 0.5
      %v776 = vmul.f32 %v762, 0.70710677
      %v777 = vmul.f32 %v763, 0.70710677
      %v778 = verf.f32.pop %v776
      %v779 = verf.f32.pop %v777
      %v780 = vadd.f32 %v778, 1.0
      %v781 = vadd.f32 %v779, 1.0
      %v782 = vmul.f32 %v774, %v780
      %v783 = vmul.f32 %v775, %v781
      %v784 = vld [vmem:[%s4] sm:$0x3]
      %v785 = vld [vmem:[%s5] sm:$0x3]
      %vm786 = vcmask 72704
      %v788 = vsel %vm786, %v785, 0
      %vm790 = vcmask 1040384
      %v792 = vsel %vm790, %v783, 0
      %794 = vmatprep.subr.mxu0 0.0
      %795 = vmatpush1.msra.mxu0 %v782
      %796 = vmatprep.subr.mxu0 0.0
      %797 = vmatpush1.msra.mxu0 %v792
      %798 = vmatprep.subr.mxu0 0.0
      %799 = vmatpush1.msra.mxu0 0.0
      %800 = vmatprep.subr.mxu0 0.0
      %801 = vmatpush1.msra.mxu0 0.0
      %802 = vmatprep.subr.mxu0 0.0
      %803 = vmatpush1.msra.mxu0 0.0
      %804 = vmatprep.subr.mxu0 0.0
      %805 = vmatpush1.msra.mxu0 0.0
      %806 = vmatprep.subr.mxu0 0.0
      %807 = vmatpush1.msra.mxu0 0.0
      %808 = vmatprep.subr.mxu0 0.0
      %809 = vmatpush1.msra.mxu0 0.0
      %810 = vmatprep.subr.mxu0 0.0
      %811 = vmatpush1.msra.mxu0 0.0
      %812 = vmatprep.subr.mxu0 0.0
      %813 = vmatpush1.msra.mxu0 0.0
      %814 = vmatprep.subr.mxu0 0.0
      %815 = vmatpush1.msra.mxu0 0.0
      %816 = vmatprep.subr.mxu0 0.0
      %817 = vmatpush1.msra.mxu0 0.0
      %818 = vmatprep.subr.mxu0 0.0
      %819 = vmatpush1.msra.mxu0 0.0
      %820 = vmatprep.subr.mxu0 0.0
      %821 = vmatpush1.msra.mxu0 0.0
      %822 = vmatprep.subr.mxu0 0.0
      %823 = vmatpush1.msra.mxu0 0.0
      %824 = vmatprep.subr.mxu0 0.0
      %825 = vmatpush1.msra.mxu0 0.0
      %826 = vmatprep.subr.mxu0 0.0
      %827 = vmatpush1.msra.mxu0 0.0
      %828 = vmatprep.subr.mxu0 0.0
      %829 = vmatpush1.msra.mxu0 0.0
      %830 = vmatprep.subr.mxu0 0.0
      %831 = vmatpush1.msra.mxu0 0.0
      %832 = vmatprep.subr.mxu0 0.0
      %833 = vmatpush1.msra.mxu0 0.0
      %834 = vmatprep.subr.mxu0 0.0
      %835 = vmatpush1.msra.mxu0 0.0
      %836 = vmatprep.subr.mxu0 0.0
      %837 = vmatpush1.msra.mxu0 0.0
      %838 = vmatprep.subr.mxu0 0.0
      %839 = vmatpush1.msra.mxu0 0.0
      %840 = vmatprep.subr.mxu0 0.0
      %841 = vmatpush1.msra.mxu0 0.0
      %842 = vmatprep.subr.mxu0 0.0
      %843 = vmatpush1.msra.mxu0 0.0
      %844 = vmatprep.subr.mxu0 0.0
      %845 = vmatpush1.msra.mxu0 0.0
      %846 = vmatprep.subr.mxu0 0.0
      %847 = vmatpush1.msra.mxu0 0.0
      %848 = vmatprep.subr.mxu0 0.0
      %849 = vmatpush1.msra.mxu0 0.0
      %850 = vmatprep.subr.mxu0 0.0
      %851 = vmatpush1.msra.mxu0 0.0
      %852 = vmatprep.subr.mxu0 0.0
      %853 = vmatpush1.msra.mxu0 0.0
      %854 = vmatprep.subr.mxu0 0.0
      %855 = vmatpush1.msra.mxu0 0.0
      %856 = vmatprep.subr.mxu0 0.0
      %857 = vmatpush1.msra.mxu0 0.0
      %858 = vmatprep.mubr.f32.mxu0 0.0
      %859 = vmatmul.mubr.f32.gmra.mrb[0].mxu0 %v788
      %v860 = vpop.f32.mrb[0].mxu0
      %v861 = vadd.f32 0.0, %v860
      %v862 = vpop.f32.mrb[0].mxu0
      %863 = vdwg.mxu0
      %v865 = vsel %vm786, %v784, 0
      %v868 = vsel %vm790, %v773, 0
      %870 = vmatprep.subr.mxu0 0.0
      %871 = vmatpush1.msra.mxu0 %v772
      %872 = vmatprep.subr.mxu0 0.0
      %873 = vmatpush1.msra.mxu0 %v868
      %874 = vmatprep.subr.mxu0 0.0
      %875 = vmatpush1.msra.mxu0 0.0
      %876 = vmatprep.subr.mxu0 0.0
      %877 = vmatpush1.msra.mxu0 0.0
      %878 = vmatprep.subr.mxu0 0.0
      %879 = vmatpush1.msra.mxu0 0.0
      %880 = vmatprep.subr.mxu0 0.0
      %881 = vmatpush1.msra.mxu0 0.0
      %882 = vmatprep.subr.mxu0 0.0
      %883 = vmatpush1.msra.mxu0 0.0
      %884 = vmatprep.subr.mxu0 0.0
      %885 = vmatpush1.msra.mxu0 0.0
      %886 = vmatprep.subr.mxu0 0.0
      %887 = vmatpush1.msra.mxu0 0.0
      %888 = vmatprep.subr.mxu0 0.0
      %889 = vmatpush1.msra.mxu0 0.0
      %890 = vmatprep.subr.mxu0 0.0
      %891 = vmatpush1.msra.mxu0 0.0
      %892 = vmatprep.subr.mxu0 0.0
      %893 = vmatpush1.msra.mxu0 0.0
      %894 = vmatprep.subr.mxu0 0.0
      %895 = vmatpush1.msra.mxu0 0.0
      %896 = vmatprep.subr.mxu0 0.0
      %897 = vmatpush1.msra.mxu0 0.0
      %898 = vmatprep.subr.mxu0 0.0
      %899 = vmatpush1.msra.mxu0 0.0
      %900 = vmatprep.subr.mxu0 0.0
      %901 = vmatpush1.msra.mxu0 0.0
      %902 = vmatprep.subr.mxu0 0.0
      %903 = vmatpush1.msra.mxu0 0.0
      %904 = vmatprep.subr.mxu0 0.0
      %905 = vmatpush1.msra.mxu0 0.0
      %906 = vmatprep.subr.mxu0 0.0
      %907 = vmatpush1.msra.mxu0 0.0
      %908 = vmatprep.subr.mxu0 0.0
      %909 = vmatpush1.msra.mxu0 0.0
      %910 = vmatprep.subr.mxu0 0.0
      %911 = vmatpush1.msra.mxu0 0.0
      %912 = vmatprep.subr.mxu0 0.0
      %913 = vmatpush1.msra.mxu0 0.0
      %914 = vmatprep.subr.mxu0 0.0
      %915 = vmatpush1.msra.mxu0 0.0
      %916 = vmatprep.subr.mxu0 0.0
      %917 = vmatpush1.msra.mxu0 0.0
      %918 = vmatprep.subr.mxu0 0.0
      %919 = vmatpush1.msra.mxu0 0.0
      %920 = vmatprep.subr.mxu0 0.0
      %921 = vmatpush1.msra.mxu0 0.0
      %922 = vmatprep.subr.mxu0 0.0
      %923 = vmatpush1.msra.mxu0 0.0
      %924 = vmatprep.subr.mxu0 0.0
      %925 = vmatpush1.msra.mxu0 0.0
      %926 = vmatprep.subr.mxu0 0.0
      %927 = vmatpush1.msra.mxu0 0.0
      %928 = vmatprep.subr.mxu0 0.0
      %929 = vmatpush1.msra.mxu0 0.0
      %930 = vmatprep.subr.mxu0 0.0
      %931 = vmatpush1.msra.mxu0 0.0
      %932 = vmatprep.subr.mxu0 0.0
      %933 = vmatpush1.msra.mxu0 0.0
      %934 = vmatprep.mubr.f32.mxu0 0.0
      %935 = vmatmul.mubr.f32.gmra.mrb[0].mxu0 %v865
      %v936 = vpop.f32.mrb[0].mxu0
      %v937 = vadd.f32 %v861, %v936
      %v938 = vpop.f32.mrb[0].mxu0
      %939 = vdwg.mxu0
      %v940 = vld [vmem:[%s6] sm:$0x3]
      %942 = vset.pattern.permute.xlu0 0
      %943 = vperm.xlu0 %942, %v940
      %v944 = vpop.permute.xlu0 %943
      %v946 = vadd.f32 %v937, %v944
      %v948 = vrot.slane %v946, 1
      %v950 = vmax.f32 %v946, %v948
      %v951 = vsub.f32 %v946, %v950
      %v952 = vmul.f32 %v951, 1.442695
      %v953 = vpow.pop %v952
      %v955 = vrot.slane %v950, 7
      %v957 = vsub.f32 %v946, %v955
      %v958 = vmul.f32 %v957, 1.442695
      %v959 = vpow.pop %v958
      %v961 = vrot.slane %v959, 1
      %v963 = vadd.f32 %v953, %v961
      %v964 = vrcp.pop %v963
      %v965 = vmul.f32 %v953, %v964
      %v967 = vrot.slane %v964, 7
      %v969 = vmul.f32 %v959, %v967
      %v970 = vsel %vm790, %v965, %v969
      %971 = vst [vmem:[%s278] sm:$0x3] %v970
      %p972 = scmp.lt.s32.totalorder %s18, 1
      %s973 = scalar_select %p972, %s18, 1
      %s974 = smul.addr %s973, 2
      %s975 = scalar_lea.vmem %s7, %s974
      // Predicated region
      $region49: #{transformer_forward.1} parent=47 // pred_check
        %p976 = pneg %p188
      $region50: #{transformer_forward.1} parent=47 // pred_check_branch
        %978 = sbr.rel (%p976) target = $region52
      $region51: #{transformer_forward.1} parent=47 // pred_region
        _
      $region52: #{transformer_forward.1} parent=47 // pred_fallthru
        _
    $region48: #{transformer_forward.1} parent=5 // pred_fallthru
      _
    %p979 = scmp.le.s32.totalorder 2, %s13
    // Predicated region
    $region53: #{transformer_forward.1} parent=5 // pred_check
      %p980 = pneg %p979
    $region54: #{transformer_forward.1} parent=5 // pred_check_branch
      %982 = sbr.rel (%p980) target = $region56
    $region55: #{transformer_forward.1} parent=5 // pred_region
      %s983 = ssub.s32 %s13, 2
      // Predicated region
      $region57: #{transformer_forward.1} parent=55 // pred_check
        %p984 = pneg %p194
      $region58: #{transformer_forward.1} parent=55 // pred_check_branch
        %986 = sbr.rel (%p984) target = $region60
      $region59: #{transformer_forward.1} parent=55 // pred_region
        %p987 = scmp.lt.s32.totalorder %s19, 1
        %s988 = scalar_select %p987, %s19, 1
        %s989 = smul.addr %s988, 2
        %s990 = scalar_lea.vmem %s7, %s989
      $region60: #{transformer_forward.1} parent=55 // pred_fallthru
        _
    $region56: #{transformer_forward.1} parent=5 // pred_fallthru
      _
  $region6: #{transformer_forward.1} parent=0 // loop_footer
    %s17 = sadd.s32 1, %s13
  $region7: #{transformer_forward.1} parent=0 // loop_footer_branch
    %12 = sbr.rel target = $region3
  $region8: #{transformer_forward.1} parent=0 // loop_exit
    _

</llo_original>
